<compile_context>
chip_gen: v7x
topology: tpu7x:2x2x1
jax: 0.10.0
libtpu: 0.0.40
codegen_flags: <defaults>
</compile_context>

<pallas_src>
import functools

import jax
import jax.numpy as jnp
from jax.experimental import pallas as pl
from jax.experimental.pallas import tpu as pltpu

_MIB = 1024 * 1024


def _round_up(x, m):
    return (x + m - 1) // m * m


def _choose_tiles(B, IPT, OPT, *, tm=512, tn=512, tk=2048):
    """(8,128)-aligned tiles; 16-row sublane alignment for bf16 operands."""
    tm = min(tm, _round_up(B, 16))
    tk = min(tk, _round_up(IPT, 128))
    np0 = _round_up(OPT, 128)
    tn = min(tn, np0)
    # v7x has 2 TensorCores: if the whole problem is a single (i, j) tile,
    # split the j axis so both cores get a parallel tile.
    if _round_up(B, 16) <= tm and np0 <= tn and np0 >= 256:
        tn = max(128, (np0 // 2) // 128 * 128)
    return tm, tn, tk


def prepare_fc_params(weight, bias, *, tn, tk, compute_dtype=jnp.bfloat16):
    """One-time (param-init) prep, hoisted out of the per-step forward:
    transpose PyTorch-layout (OPT, IPT) weight to (IPT, OPT), zero-pad to
    (Kp, Np), cast to the MXU compute dtype; bias -> padded (1, Np) f32."""
    OPT, IPT = weight.shape
    Kp = _round_up(IPT, tk)
    Np = _round_up(OPT, tn)
    wT = weight.T.astype(compute_dtype)
    if (Kp, Np) != (IPT, OPT):
        wT = jnp.zeros((Kp, Np), compute_dtype).at[:IPT, :OPT].set(wT)
    b = bias.astype(jnp.float32).reshape(1, OPT)
    if Np != OPT:
        b = jnp.zeros((1, Np), jnp.float32).at[:, :OPT].set(b)
    return wT, b


def _apply_dropout(y, seed_ref, tile_seed_offset, thresh, inv_keep):
    # Inverted dropout via the TPU HW PRNG: keep with prob (1 - p), scale by
    # 1/(1-p).  Raw int32 bits are compared against a precomputed signed
    # threshold (no int->float conversion).  Seed mixes the tile coordinates
    # so every output tile gets an independent stream.
    pltpu.prng_seed(seed_ref[0] + tile_seed_offset)
    bits = pltpu.bitcast(pltpu.prng_random_bits(y.shape), jnp.int32)
    keep = bits >= jnp.int32(thresh)
    return jnp.where(keep, y * inv_keep, 0.0)


def _fc_kernel_single_k(seed_ref, x_ref, w_ref, b_ref, out_ref, *,
                        training, thresh, inv_keep):
    # Common case: the whole contraction fits one K tile -> no k axis,
    # no accumulator scratch, no pl.when.
    y = jnp.dot(x_ref[...], w_ref[...], preferred_element_type=jnp.float32)
    y = jnp.maximum(y + b_ref[...], 0.0)
    if training:
        i = pl.program_id(0)
        j = pl.program_id(1)
        y = _apply_dropout(y, seed_ref, i * pl.num_programs(1) + j,
                           thresh, inv_keep)
    out_ref[...] = y.astype(out_ref.dtype)


def _fc_kernel_k_tiled(seed_ref, x_ref, w_ref, b_ref, out_ref, *scratch,
                       training, thresh, inv_keep, acc_in_out):
    # program ids are read at kernel top level (NOT inside pl.when bodies).
    i = pl.program_id(0)
    j = pl.program_id(1)
    k = pl.program_id(2)
    nj = pl.num_programs(1)
    nk = pl.num_programs(2)
    # Output block index is k-invariant, so it is resident across k: when the
    # output dtype is f32 we accumulate straight into it (no scratch).
    acc_ref = out_ref if acc_in_out else scratch[0]

    @pl.when(k == 0)
    def _():
        acc_ref[...] = jnp.zeros_like(acc_ref)

    acc_ref[...] += jnp.dot(
        x_ref[...], w_ref[...],
        preferred_element_type=jnp.float32).astype(acc_ref.dtype)

    @pl.when(k == nk - 1)
    def _():
        y = jnp.maximum(acc_ref[...].astype(jnp.float32) + b_ref[...], 0.0)
        if training:
            y = _apply_dropout(y, seed_ref, i * nj + j, thresh, inv_keep)
        out_ref[...] = y.astype(out_ref.dtype)


def fc_apply(x, wT, b2d, *, opt, p=0.2, training=False, seed=0,
             tm, tn, tk, compute_dtype=jnp.bfloat16, out_dtype=None):
    """Forward with pre-prepared params (wT: (Kp, Np) compute_dtype,
    b2d: (1, Np) f32).  x: (B, IPT)."""
    assert 0.0 <= p < 1.0, "dropout p must be in [0, 1)"
    B, IPT = x.shape
    Kp, Np = wT.shape
    assert Kp == _round_up(IPT, tk) and Np % tn == 0 and b2d.shape == (1, Np)
    out_dtype = out_dtype or x.dtype

    Bp = _round_up(B, tm)
    # Skip the pad/cast copy when the input is already tile-aligned bf16.
    if (Bp, Kp) == (B, IPT) and x.dtype == compute_dtype:
        xp = x
    else:
        xp = jnp.zeros((Bp, Kp), compute_dtype).at[:B, :IPT].set(
            x.astype(compute_dtype))

    # Signed-int dropout threshold for keep-prob (1 - p).
    thresh = int(p * (2.0 ** 32)) - (2 ** 31)
    thresh = max(min(thresh, 2 ** 31 - 1), -(2 ** 31))
    inv_keep = 1.0 / (1.0 - p)
    seed_arr = jnp.asarray([seed], dtype=jnp.int32)

    cbytes = jnp.dtype(compute_dtype).itemsize
    obytes = jnp.dtype(out_dtype).itemsize
    cost = pl.CostEstimate(
        flops=2 * Bp * Np * Kp,
        transcendentals=0,
        bytes_accessed=(Bp * Kp + Kp * Np) * cbytes + Np * 4 + Bp * Np * obytes)

    kt = Kp // tk
    if kt == 1:
        grid = (Bp // tm, Np // tn)
        kernel = functools.partial(_fc_kernel_single_k, training=training,
                                   thresh=thresh, inv_keep=inv_keep)
        in_specs = [
            pl.BlockSpec(memory_space=pltpu.SMEM),            # seed (scalar)
            pl.BlockSpec((tm, tk), lambda i, j: (i, 0)),      # x tile
            pl.BlockSpec((tk, tn), lambda i, j: (0, j)),      # W^T tile (K, N)
            pl.BlockSpec((1, tn), lambda i, j: (0, j)),       # bias tile
        ]
        out_spec = pl.BlockSpec((tm, tn), lambda i, j: (i, j))
        scratch_shapes = ()
        dims = ("parallel", "parallel")
        acc_bytes = 0
    else:
        grid = (Bp // tm, Np // tn, kt)
        acc_in_out = jnp.dtype(out_dtype) == jnp.dtype(jnp.float32)
        kernel = functools.partial(_fc_kernel_k_tiled, training=training,
                                   thresh=thresh, inv_keep=inv_keep,
                                   acc_in_out=acc_in_out)
        in_specs = [
            pl.BlockSpec(memory_space=pltpu.SMEM),
            pl.BlockSpec((tm, tk), lambda i, j, k: (i, k)),
            pl.BlockSpec((tk, tn), lambda i, j, k: (k, j)),
            pl.BlockSpec((1, tn), lambda i, j, k: (0, j)),
        ]
        out_spec = pl.BlockSpec((tm, tn), lambda i, j, k: (i, j))
        scratch_shapes = () if acc_in_out else (
            pltpu.VMEM((tm, tn), jnp.float32),)
        dims = ("parallel", "parallel", "arbitrary")
        acc_bytes = 0 if acc_in_out else tm * tn * 4

    # Double-buffered tile footprint; raise the scoped VMEM limit only as
    # needed and never past 64 MiB (v7x physical VMEM per TensorCore).
    vmem_est = (2 * (tm * tk + tk * tn) * cbytes + 2 * tn * 4
                + 2 * tm * tn * obytes + acc_bytes)
    vmem_limit = min(64 * _MIB, max(32 * _MIB, int(1.5 * vmem_est)))

    out_p = pl.pallas_call(
        kernel,
        out_shape=jax.ShapeDtypeStruct((Bp, Np), out_dtype),
        grid=grid,
        in_specs=in_specs,
        out_specs=out_spec,
        scratch_shapes=scratch_shapes,
        compiler_params=pltpu.CompilerParams(
            dimension_semantics=dims, vmem_limit_bytes=vmem_limit),
        cost_estimate=cost,
    )(seed_arr, xp, wT, b2d)

    return out_p[:B, :opt]


def fc_forward(x, weight, bias, *, p=0.2, training=False, seed=0,
               compute_dtype=jnp.bfloat16, out_dtype=None,
               tm=512, tn=512, tk=2048):
    """Convenience wrapper: prep params on the fly (hoist prepare_fc_params to
    param-init time in real use to avoid re-padding W every call)."""
    B, IPT = x.shape
    OPT, _ = weight.shape
    tm, tn, tk = _choose_tiles(B, IPT, OPT, tm=tm, tn=tn, tk=tk)
    wT, b2d = prepare_fc_params(weight, bias, tn=tn, tk=tk,
                                compute_dtype=compute_dtype)
    return fc_apply(x, wT, b2d, opt=OPT, p=p, training=training, seed=seed,
                    tm=tm, tn=tn, tk=tk, compute_dtype=compute_dtype,
                    out_dtype=out_dtype)


if __name__ == "__main__":
    key = jax.random.PRNGKey(0)
    k_x, k_w, k_b = jax.random.split(key, 3)

    B, IPT, OPT = 8, 32, 16
    x = jax.random.normal(k_x, (B, IPT), dtype=jnp.float32)
    bound = 1.0 / (IPT ** 0.5)               # nn.Linear default init range
    weight = jax.random.uniform(k_w, (OPT, IPT), jnp.float32, -bound, bound)
    bias = jax.random.uniform(k_b, (OPT,), jnp.float32, -bound, bound)

    # One-time param prep (what a real model does at init), then forward.
    tm, tn, tk = _choose_tiles(B, IPT, OPT)
    wT, b2d = prepare_fc_params(weight, bias, tn=tn, tk=tk)

    # Eval-mode forward (dropout is identity), matches module.eval().
    out = jax.block_until_ready(
        fc_apply(x, wT, b2d, opt=OPT, training=False, tm=tm, tn=tn, tk=tk))

    # Pure-JAX reference with the same bf16-operand / f32-accumulate matmul.
    ref = jnp.maximum(
        jnp.dot(x.astype(jnp.bfloat16), weight.T.astype(jnp.bfloat16),
                preferred_element_type=jnp.float32) + bias, 0.0)
    assert out.shape == (B, OPT)
    assert jnp.allclose(out, ref, atol=1e-2, rtol=1e-2), "mismatch vs reference"

    # Training-mode dropout uses the TPU HW PRNG; only exercised on a real TPU
    # backend (the CPU/interpret fallback cannot lower the PRNG primitives).
    if jax.default_backend() == "tpu":
        out_tr = jax.block_until_ready(
            fc_apply(x, wT, b2d, opt=OPT, p=0.2, training=True, seed=123,
                     tm=tm, tn=tn, tk=tk))
        assert out_tr.shape == (B, OPT)
        assert bool(jnp.all(jnp.isfinite(out_tr)))
        scaled = jnp.where(out_tr > 0, out_tr * 0.8, 0.0)
        assert bool(jnp.all((out_tr == 0)
                            | jnp.isclose(scaled, ref, atol=1e-2, rtol=1e-2)))

    print("KERNEL_OK")
</pallas_src>

<mosaic_0001>
module attributes {stable_mosaic.version = 11 : i64} {
  func.func @_fc_kernel_single_k(%arg0: i32, %arg1: i32, %arg2: memref<1xi32, #tpu.memory_space<smem>>, %arg3: memref<16x128xbf16, #tpu.memory_space<vmem>>, %arg4: memref<128x128xbf16, #tpu.memory_space<vmem>>, %arg5: memref<1x128xf32, #tpu.memory_space<vmem>>, %arg6: memref<16x128xf32, #tpu.memory_space<vmem>>) attributes {dimension_semantics = [#tpu.dimension_semantics<parallel>, #tpu.dimension_semantics<parallel>], iteration_bounds = array<i64: 1, 1>, scalar_prefetch = 0 : i64, scratch_operands = 0 : i64, tpu.core_type = #tpu.core_type<tc>, window_params = [{transform_indices = @transform_0, window_bounds = array<i64: 1>}, {transform_indices = @transform_1, window_bounds = array<i64: 16, 128>}, {transform_indices = @transform_2, window_bounds = array<i64: 128, 128>}, {transform_indices = @transform_3, window_bounds = array<i64: 1, 128>}, {transform_indices = @transform_4, window_bounds = array<i64: 16, 128>}]} {
    %c0 = arith.constant 0 : index
    %c0_0 = arith.constant 0 : index
    %0 = vector.load %arg3[%c0, %c0_0] : memref<16x128xbf16, #tpu.memory_space<vmem>>, vector<16x128xbf16>
    %c0_1 = arith.constant 0 : index
    %c0_2 = arith.constant 0 : index
    %1 = vector.load %arg4[%c0_1, %c0_2] : memref<128x128xbf16, #tpu.memory_space<vmem>>, vector<128x128xbf16>
    %cst = arith.constant dense<0.000000e+00> : vector<16x128xf32>
    %2 = tpu.matmul %0, %1, %cst {dimension_numbers = #tpu.dot_dimension_numbers<[1], [0], [0], [1], [0, 0, 1, 1], [], []>} : vector<16x128xbf16>, vector<128x128xbf16>, vector<16x128xf32> -> vector<16x128xf32>
    %c0_3 = arith.constant 0 : index
    %c0_4 = arith.constant 0 : index
    %3 = vector.load %arg5[%c0_3, %c0_4] : memref<1x128xf32, #tpu.memory_space<vmem>>, vector<1x128xf32>
    %4 = vector.broadcast %3 : vector<1x128xf32> to vector<16x128xf32>
    %5 = arith.addf %2, %4 : vector<16x128xf32>
    %cst_5 = arith.constant 0.000000e+00 : f32
    %6 = vector.broadcast %cst_5 : f32 to vector<16x128xf32>
    %7 = arith.maximumf %5, %6 : vector<16x128xf32>
    %c0_6 = arith.constant 0 : index
    %c0_7 = arith.constant 0 : index
    %8 = vector.load %arg6[%c0_6, %c0_7] : memref<16x128xf32, #tpu.memory_space<vmem>>, vector<16x128xf32>
    tpu.vector_store %arg6[%c0_6, %c0_7], %7 {strides = array<i32>} : memref<16x128xf32, #tpu.memory_space<vmem>>, vector<16x128xf32>,
    return
  }
  func.func @transform_0(%arg0: i32, %arg1: i32) -> i32 {
    %c0_i32 = arith.constant 0 : i32
    %c0_i32_0 = arith.constant 0 : i32
    return %c0_i32 : i32
  }
  func.func @transform_1(%arg0: i32, %arg1: i32) -> (i32, i32) {
    %c0_i32 = arith.constant 0 : i32
    %c0_i32_0 = arith.constant 0 : i32
    return %arg0, %c0_i32 : i32, i32
  }
  func.func @transform_2(%arg0: i32, %arg1: i32) -> (i32, i32) {
    %c0_i32 = arith.constant 0 : i32
    %c0_i32_0 = arith.constant 0 : i32
    return %c0_i32, %arg1 : i32, i32
  }
  func.func @transform_3(%arg0: i32, %arg1: i32) -> (i32, i32) {
    %c0_i32 = arith.constant 0 : i32
    %c0_i32_0 = arith.constant 0 : i32
    return %c0_i32, %arg1 : i32, i32
  }
  func.func @transform_4(%arg0: i32, %arg1: i32) -> (i32, i32) {
    %c0_i32 = arith.constant 0 : i32
    return %arg0, %arg1 : i32, i32
  }
}

</mosaic_0001>

<llo_original>
// kernel: tpu_custom_call.1
$region0: #{tpu_custom_call.1}
  #allocation0 [shape = 'u32[]', space=smem, size = 0x4, offset = 0x4, fixed_abs, tag = 'smem constant byte address 0x4 - core index']
  #allocation1 [shape = 'u32[144,128]{1,0:T(1,128)}', space=vmem, size = 0x12000, scoped, tag = 'internal scratch']
  #allocation2 [shape = 's32[1]{0:T(128)S(6)}', space=smem, size = 0x200, scoped, tag = 'scoped memory for tpu_custom_call.1']
  %s0 = inlined_call_operand.<no memory space> [shape: s32[1], index: 0, kind: input, shape index: {}]
  %s1 = inlined_call_operand.hbm [shape: bf16[16,128], index: 1, kind: input, shape index: {}]
  %s2 = inlined_call_operand.hbm [shape: bf16[128,128], index: 2, kind: input, shape index: {}]
  %s3 = inlined_call_operand.vmem [shape: f32[1,128], index: 3, kind: input, shape index: {}]
  %s4 = inlined_call_operand.hbm [shape: f32[16,128], index: 4, kind: output, shape index: {}]
  %s5 = sld [smem:[#allocation0]]
  $region34: #{tpu_custom_call.1} parent=0
    _
  %s7 = ssub.s32 1, %s5
  %s8 = scalar_select 0, %s7, %s5
  %9 = sst [smem:[#allocation2]] %s0
  $region1: #{tpu_custom_call.1} parent=0
    #allocation3 [shape = 'u8[4096]{0}', space=vmem, size = 0x1000, scoped, tag = 'input window, operand 1, single buffered']
    #allocation4 [shape = 's32[1]{0}', space=sflag, size = 0x4, scoped, tag = 'scoped memory for tpu_custom_call.1']
    #allocation5 [shape = 's32[1]{0}', space=sflag, size = 0x4, scoped, tag = 'scoped memory for tpu_custom_call.1']
    #allocation6 [shape = 'u8[32768]{0}', space=vmem, size = 0x8000, scoped, tag = 'input window, operand 2, single buffered']
    #allocation7 [shape = 's32[1]{0}', space=sflag, size = 0x4, scoped, tag = 'scoped memory for tpu_custom_call.1']
    #allocation8 [shape = 'u8[8192]{0}', space=vmem, size = 0x2000, scoped, tag = 'output window, operand 0, single buffered']
    %10 = vsyncpa [#allocation4], 0
    %11 = vsyncpa [#allocation7], 0
    %12 = vsyncpa [#allocation5], 0
    // Predicated region
    $region2: #{tpu_custom_call.1} parent=1 // pred_check
      _
    $region3: #{tpu_custom_call.1} parent=1 // pred_check_branch
      %14 = sbr.rel (0) target = $region5
    $region4: #{tpu_custom_call.1} parent=1 // pred_region
      _
    $region5: #{tpu_custom_call.1} parent=1 // pred_fallthru
      _
    // Predicated region
    $region6: #{tpu_custom_call.1} parent=1 // pred_check
      _
    $region7: #{tpu_custom_call.1} parent=1 // pred_check_branch
      %16 = sbr.rel (0) target = $region9
    $region8: #{tpu_custom_call.1} parent=1 // pred_region
      %s18 = ssub.s32 128, 128
      %19 = vsyncadd [#allocation4], %s18
      %s20 = sshll.u32 [#allocation3], 4
      %s21 = int_to_ptr.vmem [resolvable:$true] %s20
      %26 = dma.hbm_to_vmem [thread:$0]  %s1, 128, %s21, [#allocation4], 64, 64, 4
    $region9: #{tpu_custom_call.1} parent=1 // pred_fallthru
      _
    // Predicated region
    $region10: #{tpu_custom_call.1} parent=1 // pred_check
      _
    $region11: #{tpu_custom_call.1} parent=1 // pred_check_branch
      %28 = sbr.rel (0) target = $region13
    $region12: #{tpu_custom_call.1} parent=1 // pred_region
      %s30 = ssub.s32 1024, 1024
      %31 = vsyncadd [#allocation7], %s30
      %s32 = sshll.u32 [#allocation6], 4
      %s33 = int_to_ptr.vmem [resolvable:$true] %s32
      %38 = dma.hbm_to_vmem [thread:$0]  %s2, 1024, %s33, [#allocation7], 64, 64, 4
    $region13: #{tpu_custom_call.1} parent=1 // pred_fallthru
      _
    // Predicated region
    $region14: #{tpu_custom_call.1} parent=1 // pred_check
      _
    $region15: #{tpu_custom_call.1} parent=1 // pred_check_branch
      %40 = sbr.rel (0) target = $region17
    $region16: #{tpu_custom_call.1} parent=1 // pred_region
      _
    $region17: #{tpu_custom_call.1} parent=1 // pred_fallthru
      _
    // Predicated region
    $region18: #{tpu_custom_call.1} parent=1 // pred_check
      _
    $region19: #{tpu_custom_call.1} parent=1 // pred_check_branch
      %42 = sbr.rel (0) target = $region21
    $region20: #{tpu_custom_call.1} parent=1 // pred_region
      %43 = dma.done [#allocation4], 128
    $region21: #{tpu_custom_call.1} parent=1 // pred_fallthru
      _
    // Predicated region
    $region22: #{tpu_custom_call.1} parent=1 // pred_check
      _
    $region23: #{tpu_custom_call.1} parent=1 // pred_check_branch
      %45 = sbr.rel (0) target = $region25
    $region24: #{tpu_custom_call.1} parent=1 // pred_region
      %46 = dma.done [#allocation7], 1024
    $region25: #{tpu_custom_call.1} parent=1 // pred_fallthru
      _
    %v48 = vld [vmem:[#allocation3] sm:$0xf]
    %v49 = vld [vmem:[#allocation3 + $0x4] sm:$0xf]
    %v50 = vld [vmem:[#allocation6] sm:$0xf]
    %v51 = vld [vmem:[#allocation6 + $0x4] sm:$0xf]
    %v52 = vld [vmem:[#allocation6 + $0x8] sm:$0xf]
    %v53 = vld [vmem:[#allocation6 + $0xc] sm:$0xf]
    %v54 = vld [vmem:[#allocation6 + $0x10] sm:$0xf]
    %v55 = vld [vmem:[#allocation6 + $0x14] sm:$0xf]
    %v56 = vld [vmem:[#allocation6 + $0x18] sm:$0xf]
    %v57 = vld [vmem:[#allocation6 + $0x1c] sm:$0xf]
    %v58 = vld [vmem:[#allocation6 + $0x20] sm:$0xf]
    %v59 = vld [vmem:[#allocation6 + $0x24] sm:$0xf]
    %v60 = vld [vmem:[#allocation6 + $0x28] sm:$0xf]
    %v61 = vld [vmem:[#allocation6 + $0x2c] sm:$0xf]
    %v62 = vld [vmem:[#allocation6 + $0x30] sm:$0xf]
    %v63 = vld [vmem:[#allocation6 + $0x34] sm:$0xf]
    %v64 = vld [vmem:[#allocation6 + $0x38] sm:$0xf]
    %v65 = vld [vmem:[#allocation6 + $0x3c] sm:$0xf]
    %v66 = vld [vmem:[%s3] sm:$0x1]
    %v68 = vlaneseq
    %v69 = vshrl.u32 %v68, 7
    %v70 = vsub.s32 0, %v69
    %v71 = vrot.slane %v66, %v70
    %v75 = vunpack.c.l.b16 %v48
    %v76 = vunpack.c.l.b16 %v49
    %v77 = vpack.c.b16 %v76, %v75
    %v95 = vunpack.c.l.b16 %v50
    %v96 = vunpack.c.l.b16 %v51
    %v97 = vunpack.c.l.b16 %v52
    %v98 = vunpack.c.l.b16 %v53
    %v99 = vunpack.c.l.b16 %v54
    %v100 = vunpack.c.l.b16 %v55
    %v101 = vunpack.c.l.b16 %v56
    %v102 = vunpack.c.l.b16 %v57
    %v103 = vunpack.c.l.b16 %v58
    %v104 = vunpack.c.l.b16 %v59
    %v105 = vunpack.c.l.b16 %v60
    %v106 = vunpack.c.l.b16 %v61
    %v107 = vunpack.c.l.b16 %v62
    %v108 = vunpack.c.l.b16 %v63
    %v109 = vunpack.c.l.b16 %v64
    %v110 = vunpack.c.l.b16 %v65
    %v111 = vpack.c.b16 %v96, %v95
    %v112 = vpack.c.b16 %v98, %v97
    %v113 = vpack.c.b16 %v100, %v99
    %v114 = vpack.c.b16 %v102, %v101
    %v115 = vpack.c.b16 %v104, %v103
    %v116 = vpack.c.b16 %v106, %v105
    %v117 = vpack.c.b16 %v108, %v107
    %v118 = vpack.c.b16 %v110, %v109
    %127 = vmatprep.subr.bf16.mxu0 0
    %128 = vmatpush1.bf16.msra.mxu0 %v111
    %129 = vmatprep.subr.bf16.mxu0 0
    %130 = vmatpush1.bf16.msra.mxu0 %v112
    %131 = vmatprep.subr.bf16.mxu0 0
    %132 = vmatpush1.bf16.msra.mxu0 %v113
    %133 = vmatprep.subr.bf16.mxu0 0
    %134 = vmatpush1.bf16.msra.mxu0 %v114
    %135 = vmatprep.subr.bf16.mxu0 0
    %136 = vmatpush1.bf16.msra.mxu0 %v115
    %137 = vmatprep.subr.bf16.mxu0 0
    %138 = vmatpush1.bf16.msra.mxu0 %v116
    %139 = vmatprep.subr.bf16.mxu0 0
    %140 = vmatpush1.bf16.msra.mxu0 %v117
    %141 = vmatprep.subr.bf16.mxu0 0
    %142 = vmatpush1.bf16.msra.mxu0 %v118
    %143 = vmatprep.subr.bf16.mxu0 0
    %144 = vmatpush1.bf16.msra.mxu0 0
    %145 = vmatprep.subr.bf16.mxu0 0
    %146 = vmatpush1.bf16.msra.mxu0 0
    %147 = vmatprep.subr.bf16.mxu0 0
    %148 = vmatpush1.bf16.msra.mxu0 0
    %149 = vmatprep.subr.bf16.mxu0 0
    %150 = vmatpush1.bf16.msra.mxu0 0
    %151 = vmatprep.subr.bf16.mxu0 0
    %152 = vmatpush1.bf16.msra.mxu0 0
    %153 = vmatprep.subr.bf16.mxu0 0
    %154 = vmatpush1.bf16.msra.mxu0 0
    %155 = vmatprep.subr.bf16.mxu0 0
    %156 = vmatpush1.bf16.msra.mxu0 0
    %157 = vmatprep.subr.bf16.mxu0 0
    %158 = vmatpush1.bf16.msra.mxu0 0
    %159 = vmatprep.mubr.bf16.mxu0 0
    %160 = vmatmul.mubr.bf16.gmra.mrb[0].mxu0 %v77
    %v161 = vpop.f32.mrb[0].mxu0
    %v162 = vadd.f32 %v71, %v161
    %v163 = vpop.f32.mrb[0].mxu0
    %v164 = vpop.f32.mrb[0].mxu0
    %v165 = vadd.f32 %v71, %v164
    %v166 = vpop.f32.mrb[0].mxu0
    %167 = vdwg.mxu0
    %v168 = vmax.f32 %v162, 0.0
    %v169 = vmax.f32 %v165, 0.0
    %170 = vst [vmem:[#allocation8] sm:$0xff] %v168
    %171 = vst [vmem:[#allocation8 + $0x8] sm:$0xff] %v169
    // Predicated region
    $region26: #{tpu_custom_call.1} parent=1 // pred_check
      _
    $region27: #{tpu_custom_call.1} parent=1 // pred_check_branch
      %173 = sbr.rel (0) target = $region29
    $region28: #{tpu_custom_call.1} parent=1 // pred_region
      %s175 = ssub.s32 256, 256
      %176 = vsyncadd [#allocation5], %s175
      %s177 = sshll.u32 [#allocation8], 4
      %s178 = int_to_ptr.vmem [resolvable:$true] %s177
      %183 = dma.vmem_to_hbm [thread:$0]  %s178, 256, %s4, [#allocation5], 128, 128, 8
    $region29: #{tpu_custom_call.1} parent=1 // pred_fallthru
      _
    // Predicated region
    $region30: #{tpu_custom_call.1} parent=1 // pred_check
      _
    $region31: #{tpu_custom_call.1} parent=1 // pred_check_branch
      %185 = sbr.rel (0) target = $region33
    $region32: #{tpu_custom_call.1} parent=1 // pred_region
      %186 = dma.done [#allocation5], 256
    $region33: #{tpu_custom_call.1} parent=1 // pred_fallthru
      _
    %187 = vsyncpa [#allocation4], 1
    %188 = vsyncpa [#allocation7], 1
    %189 = vsyncpa [#allocation5], 1

</llo_original>
